<compile_context>
chip_gen: v6e
topology: v6e:2x2x1
jax: 0.10.0
libtpu: 0.0.40
codegen_flags: <defaults>
</compile_context>

<pallas_src>
import functools

import jax
import jax.numpy as jnp
from jax.experimental import pallas as pl
from jax.experimental.pallas import tpu as pltpu

_LANE = 128
_MAX_BLOCK_ROWS = 2048  # (2048, 128) f32 tile = 1 MiB per input per buffer


def _round_up(x, m):
    return (x + m - 1) // m * m


def _l1_loss_kernel(a_ref, b_ref, out_ref, acc_ref, *, total_n, rows, block_rows):
    i = pl.program_id(0)

    @pl.when(i == 0)
    def _():
        acc_ref[...] = jnp.zeros_like(acc_ref)

    # Cast in-kernel (keeps HBM traffic at the native input width).
    diff = jnp.abs(a_ref[...].astype(jnp.float32) - b_ref[...].astype(jnp.float32))

    # The last grid step may map to a partial block whose trailing rows hold
    # garbage (Pallas does not zero-fill edge blocks) -> mask them out.
    if rows % block_rows != 0:
        row_ids = i * block_rows + jax.lax.broadcasted_iota(
            jnp.int32, (block_rows, 1), 0
        )
        diff = jnp.where(row_ids < rows, diff, 0.0)

    # Elementwise accumulate on the VPU; no per-step scalar (XLU) reduction.
    acc_ref[...] += diff

    @pl.when(i == pl.num_programs(0) - 1)
    def _():
        out_ref[0] = jnp.sum(acc_ref[...]) / jnp.float32(total_n)


def identity_loss(id_images, original_images):
    """Mean absolute error between two equal-shaped arrays (scalar f32)."""
    assert id_images.shape == original_images.shape

    n = id_images.size
    a = id_images.reshape(-1)
    b = original_images.reshape(-1)

    # Lane-dense view needs n % 128 == 0; typical image tensors satisfy this,
    # so the pad below is normally skipped entirely.  Zero padding contributes
    # 0 to |a - b| and the divisor uses the true element count.
    lane_pad = (-n) % _LANE
    if lane_pad:
        a = jnp.pad(a, (0, lane_pad))
        b = jnp.pad(b, (0, lane_pad))

    rows = a.size // _LANE
    a2 = a.reshape(rows, _LANE)
    b2 = b.reshape(rows, _LANE)

    # Sublane multiple: 8 for 4-byte dtypes, 16 for bf16/fp16, 32 for 1-byte.
    sub = max(8, 32 // max(1, a2.dtype.itemsize))
    block_rows = min(_MAX_BLOCK_ROWS, _round_up(rows, sub))
    grid = (pl.cdiv(rows, block_rows),)

    out = pl.pallas_call(
        functools.partial(
            _l1_loss_kernel, total_n=n, rows=rows, block_rows=block_rows
        ),
        out_shape=jax.ShapeDtypeStruct((1,), jnp.float32),
        grid_spec=pltpu.PrefetchScalarGridSpec(
            num_scalar_prefetch=0,
            grid=grid,
            in_specs=[
                pl.BlockSpec((block_rows, _LANE), lambda i: (i, 0)),
                pl.BlockSpec((block_rows, _LANE), lambda i: (i, 0)),
            ],
            out_specs=pl.BlockSpec(memory_space=pltpu.SMEM),
            scratch_shapes=[pltpu.VMEM((block_rows, _LANE), jnp.float32)],
        ),
        compiler_params=pltpu.CompilerParams(
            dimension_semantics=("arbitrary",)  # sequential reduction axis
        ),
    )(a2, b2)
    return out[0]


if __name__ == "__main__":
    key = jax.random.PRNGKey(0)
    k1, k2 = jax.random.split(key)

    # NCHW, small shapes: batch=2, channels=4, spatial=16x16
    id_images = jax.random.normal(k1, (2, 4, 16, 16), dtype=jnp.float32)
    original_images = jax.random.normal(k2, (2, 4, 16, 16), dtype=jnp.float32)

    loss = identity_loss(id_images, original_images)
    jax.block_until_ready(loss)

    # sanity check against plain JAX reference
    ref = jnp.mean(jnp.abs(id_images - original_images))
    assert jnp.allclose(loss, ref, rtol=1e-6, atol=1e-6), (loss, ref)

    print("KERNEL_OK")
</pallas_src>

<mosaic_0001>
module attributes {stable_mosaic.version = 11 : i64} {
  func.func @_l1_loss_kernel(%arg0: i32, %arg1: memref<16x128xf32, #tpu.memory_space<vmem>>, %arg2: memref<16x128xf32, #tpu.memory_space<vmem>>, %arg3: memref<1xf32, #tpu.memory_space<smem>>, %arg4: memref<16x128xf32, #tpu.memory_space<vmem>>) attributes {dimension_semantics = [#tpu.dimension_semantics<arbitrary>], iteration_bounds = array<i64: 1>, scalar_prefetch = 0 : i64, scratch_operands = 1 : i64, tpu.core_type = #tpu.core_type<tc>, window_params = [{transform_indices = @transform_0, window_bounds = array<i64: 16, 128>}, {transform_indices = @transform_1, window_bounds = array<i64: 16, 128>}, {transform_indices = @transform_2, window_bounds = array<i64: 1>}]} {
    %c0_i32 = arith.constant 0 : i32
    %0 = arith.cmpi eq, %arg0, %c0_i32 : i32
    %1 = arith.extui %0 : i1 to i32
    %c0_i32_0 = arith.constant 0 : i32
    %2 = arith.cmpi ne, %1, %c0_i32_0 : i32
    scf.if %2 {
      %cst = arith.constant 0.000000e+00 : f32
      %13 = vector.broadcast %cst : f32 to vector<16x128xf32>
      %c0_10 = arith.constant 0 : index
      %c0_11 = arith.constant 0 : index
      %14 = vector.load %arg4[%c0_10, %c0_11] : memref<16x128xf32, #tpu.memory_space<vmem>>, vector<16x128xf32>
      tpu.vector_store %arg4[%c0_10, %c0_11], %13 {strides = array<i32>} : memref<16x128xf32, #tpu.memory_space<vmem>>, vector<16x128xf32>,
    } else {
    }
    %c0 = arith.constant 0 : index
    %c0_1 = arith.constant 0 : index
    %3 = vector.load %arg1[%c0, %c0_1] : memref<16x128xf32, #tpu.memory_space<vmem>>, vector<16x128xf32>
    %c0_2 = arith.constant 0 : index
    %c0_3 = arith.constant 0 : index
    %4 = vector.load %arg2[%c0_2, %c0_3] : memref<16x128xf32, #tpu.memory_space<vmem>>, vector<16x128xf32>
    %5 = arith.subf %3, %4 : vector<16x128xf32>
    %6 = math.absf %5 : vector<16x128xf32>
    %c0_4 = arith.constant 0 : index
    %c0_5 = arith.constant 0 : index
    %7 = vector.load %arg4[%c0_4, %c0_5] : memref<16x128xf32, #tpu.memory_space<vmem>>, vector<16x128xf32>
    %8 = arith.addf %7, %6 : vector<16x128xf32>
    %c0_6 = arith.constant 0 : index
    %c0_7 = arith.constant 0 : index
    %9 = vector.load %arg4[%c0_6, %c0_7] : memref<16x128xf32, #tpu.memory_space<vmem>>, vector<16x128xf32>
    tpu.vector_store %arg4[%c0_6, %c0_7], %8 {strides = array<i32>} : memref<16x128xf32, #tpu.memory_space<vmem>>, vector<16x128xf32>,
    %c0_i32_8 = arith.constant 0 : i32
    %10 = arith.cmpi eq, %arg0, %c0_i32_8 : i32
    %11 = arith.extui %10 : i1 to i32
    %c0_i32_9 = arith.constant 0 : i32
    %12 = arith.cmpi ne, %11, %c0_i32_9 : i32
    scf.if %12 {
      %c0_10 = arith.constant 0 : index
      %c0_11 = arith.constant 0 : index
      %13 = vector.load %arg4[%c0_10, %c0_11] : memref<16x128xf32, #tpu.memory_space<vmem>>, vector<16x128xf32>
      %14 = vector.shape_cast %13 : vector<16x128xf32> to vector<1x16x128xf32>
      %cst = arith.constant dense<0.000000e+00> : vector<1xf32>
      %15 = vector.multi_reduction <add>, %14, %cst [1, 2] : vector<1x16x128xf32> to vector<1xf32>
      %16 = vector.shape_cast %15 : vector<1xf32> to vector<1x1x1xf32>
      %17 = vector.extract %16[0, 0, 0] : f32 from vector<1x1x1xf32>
      %cst_12 = arith.constant 2.048000e+03 : f32
      %18 = arith.divf %17, %cst_12 : f32
      %c0_13 = arith.constant 0 : index
      %19 = memref.load %arg3[%c0_13] : memref<1xf32, #tpu.memory_space<smem>>
      memref.store %18, %arg3[%c0_13] : memref<1xf32, #tpu.memory_space<smem>>
    } else {
    }
    return
  }
  func.func @transform_0(%arg0: i32) -> (i32, i32) {
    %c0_i32 = arith.constant 0 : i32
    %c0_i32_0 = arith.constant 0 : i32
    return %arg0, %c0_i32 : i32, i32
  }
  func.func @transform_1(%arg0: i32) -> (i32, i32) {
    %c0_i32 = arith.constant 0 : i32
    %c0_i32_0 = arith.constant 0 : i32
    return %arg0, %c0_i32 : i32, i32
  }
  func.func @transform_2(%arg0: i32) -> i32 {
    %c0_i32 = arith.constant 0 : i32
    %c0_i32_0 = arith.constant 0 : i32
    return %c0_i32 : i32
  }
}

</mosaic_0001>

<llo_original>
// kernel: tpu_custom_call.1
$region0: #{tpu_custom_call.1}
  #allocation0 [shape = 'u32[]', space=smem, size = 0x4, offset = 0x4, fixed_abs, tag = 'smem constant byte address 0x4 - core index']
  #allocation1 [shape = 'u32[144,128]{1,0:T(1,128)}', space=vmem, size = 0x12000, scoped, tag = 'internal scratch']
  #allocation2 [shape = 'f32[16,128]{1,0:T(8,128)}', space=vmem, size = 0x2000, scoped, tag = 'scratch operand']
  %s0 = inlined_call_operand.hbm [shape: f32[16,128], index: 0, kind: input, shape index: {}]
  %s1 = inlined_call_operand.hbm [shape: f32[16,128], index: 1, kind: input, shape index: {}]
  %s2 = inlined_call_operand.hbm [shape: f32[1], index: 2, kind: output, shape index: {}]
  %s3 = sld [smem:[#allocation0]]
  $region34: #{tpu_custom_call.1} parent=0
    _
  %s5 = ssub.s32 1, %s3
  %s6 = scalar_select 0, %s5, %s3
  $region1: #{tpu_custom_call.1} parent=0
    #allocation3 [shape = 'u8[8192]{0}', space=vmem, size = 0x2000, scoped, tag = 'input window, operand 0, single buffered']
    #allocation4 [shape = 's32[1]{0}', space=sflag, size = 0x4, scoped, tag = 'scoped memory for tpu_custom_call.1']
    #allocation5 [shape = 's32[1]{0}', space=sflag, size = 0x4, scoped, tag = 'scoped memory for tpu_custom_call.1']
    #allocation6 [shape = 'u8[8192]{0}', space=vmem, size = 0x2000, scoped, tag = 'input window, operand 1, single buffered']
    #allocation7 [shape = 's32[1]{0}', space=sflag, size = 0x4, scoped, tag = 'scoped memory for tpu_custom_call.1']
    #allocation8 [shape = 'u8[512]{0}', space=smem, size = 0x200, scoped, tag = 'output window, operand 0, single buffered']
    %7 = vsyncpa [#allocation4], 0
    %8 = vsyncpa [#allocation7], 0
    %9 = vsyncpa [#allocation5], 0
    // Predicated region
    $region2: #{tpu_custom_call.1} parent=1 // pred_check
      _
    $region3: #{tpu_custom_call.1} parent=1 // pred_check_branch
      %11 = sbr.rel (0) target = $region5
    $region4: #{tpu_custom_call.1} parent=1 // pred_region
      %s13 = ssub.s32 256, 256
      %14 = vsyncadd [#allocation4], %s13
      %s15 = sshll.u32 [#allocation3], 4
      %s16 = int_to_ptr.vmem [resolvable:$true] %s15
      %21 = dma.hbm_to_vmem [thread:$0]  %s0, 256, %s16, [#allocation4], 128, 128, 8
    $region5: #{tpu_custom_call.1} parent=1 // pred_fallthru
      _
    // Predicated region
    $region6: #{tpu_custom_call.1} parent=1 // pred_check
      _
    $region7: #{tpu_custom_call.1} parent=1 // pred_check_branch
      %23 = sbr.rel (0) target = $region9
    $region8: #{tpu_custom_call.1} parent=1 // pred_region
      %s25 = ssub.s32 256, 256
      %26 = vsyncadd [#allocation7], %s25
      %s27 = sshll.u32 [#allocation6], 4
      %s28 = int_to_ptr.vmem [resolvable:$true] %s27
      %33 = dma.hbm_to_vmem [thread:$0]  %s1, 256, %s28, [#allocation7], 128, 128, 8
    $region9: #{tpu_custom_call.1} parent=1 // pred_fallthru
      _
    // Predicated region
    $region10: #{tpu_custom_call.1} parent=1 // pred_check
      _
    $region11: #{tpu_custom_call.1} parent=1 // pred_check_branch
      %35 = sbr.rel (0) target = $region13
    $region12: #{tpu_custom_call.1} parent=1 // pred_region
      %36 = dma.done [#allocation4], 256
    $region13: #{tpu_custom_call.1} parent=1 // pred_fallthru
      _
    // Predicated region
    $region14: #{tpu_custom_call.1} parent=1 // pred_check
      _
    $region15: #{tpu_custom_call.1} parent=1 // pred_check_branch
      %38 = sbr.rel (0) target = $region17
    $region16: #{tpu_custom_call.1} parent=1 // pred_region
      %39 = dma.done [#allocation7], 256
    $region17: #{tpu_custom_call.1} parent=1 // pred_fallthru
      _
    %p40 = scmp.eq.s32.totalorder 0, 0
    // Predicated region
    $region18: #{tpu_custom_call.1} parent=1 // pred_check
      %p41 = pneg %p40
    $region19: #{tpu_custom_call.1} parent=1 // pred_check_branch
      %43 = sbr.rel (%p41) target = $region21
    $region20: #{tpu_custom_call.1} parent=1 // pred_region
      %44 = vst [vmem:[#allocation2] sm:$0xff] 0.0
      %45 = vst [vmem:[#allocation2 + $0x8] sm:$0xff] 0.0
    $region21: #{tpu_custom_call.1} parent=1 // pred_fallthru
      _
    %v46 = vld [vmem:[#allocation3] sm:$0xff]
    %v47 = vld [vmem:[#allocation3 + $0x8] sm:$0xff]
    %v48 = vld [vmem:[#allocation6] sm:$0xff]
    %v49 = vld [vmem:[#allocation6 + $0x8] sm:$0xff]
    %v50 = vsub.f32 %v46, %v48
    %v51 = vsub.f32 %v47, %v49
    %v52 = vand.u32 2147483647, %v50
    %v53 = vand.u32 2147483647, %v51
    %v54 = vld [vmem:[#allocation2] sm:$0xff]
    %v55 = vld [vmem:[#allocation2 + $0x8] sm:$0xff]
    %v56 = vadd.f32 %v54, %v52
    %v57 = vadd.f32 %v55, %v53
    %58 = vst [vmem:[#allocation2] sm:$0xff] %v56
    %59 = vst [vmem:[#allocation2 + $0x8] sm:$0xff] %v57
    // Predicated region
    $region22: #{tpu_custom_call.1} parent=1 // pred_check
      %p60 = pneg %p40
    $region23: #{tpu_custom_call.1} parent=1 // pred_check_branch
      %62 = sbr.rel (%p60) target = $region25
    $region24: #{tpu_custom_call.1} parent=1 // pred_region
      %v63 = vld [vmem:[#allocation2] sm:$0xff]
      %v64 = vld [vmem:[#allocation2 + $0x8] sm:$0xff]
      %v65 = vadd.f32 %v63, %v64
      %66 = vadd.xlane.f32.xlu0 %v65
      %v67 = vpop.xlane.xlu0 %66
      %v68 = vrot.slane %v67, 4
      %v69 = vadd.f32 %v67, %v68
      %v70 = vrot.slane %v69, 2
      %v71 = vadd.f32 %v69, %v70
      %v72 = vrot.slane %v71, 1
      %v73 = vadd.f32 %v71, %v72
      %s74 = vtos %v73
      %v75 = vrcp.pop 2048.0
      %s76 = vtos %v75
      %s77 = smul.f32 %s74, %s76
      %s78 = scalar_lea.smem [#allocation8], 0
      %79 = sst [smem:[%s78]] %s77
    $region25: #{tpu_custom_call.1} parent=1 // pred_fallthru
      _
    // Predicated region
    $region26: #{tpu_custom_call.1} parent=1 // pred_check
      _
    $region27: #{tpu_custom_call.1} parent=1 // pred_check_branch
      %81 = sbr.rel (0) target = $region29
    $region28: #{tpu_custom_call.1} parent=1 // pred_region
      %s83 = ssub.s32 16, 16
      %84 = vsyncadd [#allocation5], %s83
      %87 = dma.smem_to_hbm [#allocation8], 16, %s2, [#allocation5]
    $region29: #{tpu_custom_call.1} parent=1 // pred_fallthru
      _
    // Predicated region
    $region30: #{tpu_custom_call.1} parent=1 // pred_check
      _
    $region31: #{tpu_custom_call.1} parent=1 // pred_check_branch
      %89 = sbr.rel (0) target = $region33
    $region32: #{tpu_custom_call.1} parent=1 // pred_region
      %90 = dma.done [#allocation5], 16
    $region33: #{tpu_custom_call.1} parent=1 // pred_fallthru
      _
    %91 = sfence
    %92 = vsyncpa [#allocation4], 1
    %93 = vsyncpa [#allocation7], 1
    %94 = vsyncpa [#allocation5], 1

</llo_original>
